<compile_context>
chip_gen: v7x
topology: tpu7x:2x2x1
jax: 0.10.0
libtpu: 0.0.40
codegen_flags: <defaults>
</compile_context>

<pallas_src>
import functools

import jax
import jax.numpy as jnp
from jax.experimental import pallas as pl
from jax.experimental.pallas import tpu as pltpu


def _round_up(x, m):
    return ((x + m - 1) // m) * m


# -----------------------------------------------------------------------------
# Kernel A: logits laid out (N, C, S)  — class on sublanes, spatial on lanes
# -----------------------------------------------------------------------------
def _ce_ncs_kernel(logits_ref, targets_ref, *rest, spatial, tile_s, inv_total,
                   has_mask, needs_tail_mask):
    if has_mask:
        mask_ref, out_ref, acc_ref = rest
    else:
        mask_ref = None
        out_ref, acc_ref = rest

    n_idx = pl.program_id(0)
    s_idx = pl.program_id(1)

    @pl.when((n_idx == 0) & (s_idx == 0))
    def _():
        acc_ref[...] = jnp.zeros_like(acc_ref)

    logits = logits_ref[...].astype(jnp.float32)          # (C, TILE_S)
    tgt = targets_ref[...].astype(jnp.int32)              # (1, TILE_S)

    # numerically stable log-sum-exp over the class (sublane) axis
    m = jnp.max(logits, axis=0, keepdims=True)            # (1, TILE_S)
    lse = m + jnp.log(jnp.sum(jnp.exp(logits - m), axis=0, keepdims=True))

    # pick the target-class logit via one-hot compare (no dynamic gather on TPU)
    cls_ids = jax.lax.broadcasted_iota(jnp.int32, logits.shape, 0)
    picked = jnp.sum(jnp.where(cls_ids == tgt, logits, 0.0), axis=0,
                     keepdims=True)                        # (1, TILE_S)

    ce = lse - picked                                      # (1, TILE_S)
    if has_mask:
        ce = ce * mask_ref[...].astype(jnp.float32)

    if needs_tail_mask:
        # zero lanes past the true spatial extent (tail tile) -- also kills any
        # NaN/Inf coming from out-of-bounds garbage in padded lanes.
        lane_ids = jax.lax.broadcasted_iota(jnp.int32, ce.shape, 1)
        valid = (s_idx * tile_s + lane_ids) < spatial
        ce = jnp.where(valid, ce, 0.0)

    acc_ref[...] += ce

    @pl.when((n_idx == pl.num_programs(0) - 1) &
             (s_idx == pl.num_programs(1) - 1))
    def _():
        # PyTorch's .mean() divides by the total element count (mask or not).
        out_ref[...] = jnp.sum(acc_ref[...], keepdims=True) * inv_total


def _ce_ncs(logits_ncs, targets_ns, mask_ns):
    N, C, S = logits_ncs.shape
    has_mask = mask_ns is not None

    # lane-dense spatial tile (multiple of 128), sized to keep the double-
    # buffered logits stream around <= 8 MiB (fits v5e's 16 MiB scoped VMEM).
    itemsize = jnp.dtype(logits_ncs.dtype).itemsize
    budget_bytes = 8 * 1024 * 1024
    tile_s = (budget_bytes // (2 * C * itemsize)) // 128 * 128
    tile_s = max(128, min(tile_s, 8192, _round_up(S, 128)))
    num_s_tiles = pl.cdiv(S, tile_s)
    needs_tail_mask = (S % tile_s) != 0

    targets_3d = targets_ns.reshape(N, 1, S).astype(jnp.int32)

    inputs = [logits_ncs, targets_3d]
    in_specs = [
        pl.BlockSpec((None, C, tile_s), lambda n, s: (n, 0, s)),
        pl.BlockSpec((None, 1, tile_s), lambda n, s: (n, 0, s)),
    ]
    if has_mask:
        inputs.append(mask_ns.reshape(N, 1, S))
        in_specs.append(pl.BlockSpec((None, 1, tile_s), lambda n, s: (n, 0, s)))

    kernel = functools.partial(
        _ce_ncs_kernel, spatial=S, tile_s=tile_s,
        inv_total=1.0 / float(N * S), has_mask=has_mask,
        needs_tail_mask=needs_tail_mask)

    # TODO(synk): for LM-sized class counts add a class-chunk grid axis with an
    # online logsumexp (keeps blocks inside v7x's 64 MiB VMEM).
    # TODO(synk): emit per-block partial sums with a "parallel" axis to use both
    # v7x TensorCores; the single shared accumulator keeps the grid "arbitrary".
    out = pl.pallas_call(
        kernel,
        out_shape=jax.ShapeDtypeStruct((1, 1), jnp.float32),
        grid_spec=pltpu.PrefetchScalarGridSpec(
            num_scalar_prefetch=0,
            grid=(N, num_s_tiles),
            in_specs=in_specs,
            out_specs=pl.BlockSpec((1, 1), lambda n, s: (0, 0)),
            scratch_shapes=[pltpu.VMEM((1, tile_s), jnp.float32)],
        ),
        compiler_params=pltpu.CompilerParams(
            dimension_semantics=("arbitrary", "arbitrary")),
    )(*inputs)
    return out[0, 0]


# -----------------------------------------------------------------------------
# Kernel B: plain (R, C) logits  — classes on lanes, rows tiled on sublanes
# -----------------------------------------------------------------------------
def _ce_rows_kernel(logits_ref, targets_ref, *rest, rows, tile_r, inv_total,
                    has_mask, needs_tail_mask):
    if has_mask:
        mask_ref, out_ref, acc_ref = rest
    else:
        mask_ref = None
        out_ref, acc_ref = rest

    i = pl.program_id(0)

    @pl.when(i == 0)
    def _():
        acc_ref[...] = jnp.zeros_like(acc_ref)

    logits = logits_ref[...].astype(jnp.float32)          # (TILE_R, C)
    tgt = targets_ref[...].astype(jnp.int32)              # (TILE_R, 1)

    m = jnp.max(logits, axis=1, keepdims=True)
    lse = m + jnp.log(jnp.sum(jnp.exp(logits - m), axis=1, keepdims=True))

    cls_ids = jax.lax.broadcasted_iota(jnp.int32, logits.shape, 1)
    picked = jnp.sum(jnp.where(cls_ids == tgt, logits, 0.0), axis=1,
                     keepdims=True)                        # (TILE_R, 1)

    ce = lse - picked
    if has_mask:
        ce = ce * mask_ref[...].astype(jnp.float32)

    if needs_tail_mask:
        row_ids = jax.lax.broadcasted_iota(jnp.int32, ce.shape, 0)
        valid = (i * tile_r + row_ids) < rows
        ce = jnp.where(valid, ce, 0.0)

    acc_ref[...] += ce

    @pl.when(i == pl.num_programs(0) - 1)
    def _():
        out_ref[...] = jnp.sum(acc_ref[...], keepdims=True) * inv_total


def _ce_rows(logits_2d, targets_1d, mask_1d):
    R, C = logits_2d.shape
    has_mask = mask_1d is not None

    itemsize = jnp.dtype(logits_2d.dtype).itemsize
    budget_bytes = 8 * 1024 * 1024
    tile_r = (budget_bytes // (2 * C * itemsize)) // 8 * 8
    tile_r = max(8, min(tile_r, 2048, _round_up(R, 8)))
    num_tiles = pl.cdiv(R, tile_r)
    needs_tail_mask = (R % tile_r) != 0

    targets_2d = targets_1d.reshape(R, 1).astype(jnp.int32)

    inputs = [logits_2d, targets_2d]
    in_specs = [
        pl.BlockSpec((tile_r, C), lambda i: (i, 0)),
        pl.BlockSpec((tile_r, 1), lambda i: (i, 0)),
    ]
    if has_mask:
        inputs.append(mask_1d.reshape(R, 1))
        in_specs.append(pl.BlockSpec((tile_r, 1), lambda i: (i, 0)))

    kernel = functools.partial(
        _ce_rows_kernel, rows=R, tile_r=tile_r,
        inv_total=1.0 / float(R), has_mask=has_mask,
        needs_tail_mask=needs_tail_mask)

    out = pl.pallas_call(
        kernel,
        out_shape=jax.ShapeDtypeStruct((1, 1), jnp.float32),
        grid_spec=pltpu.PrefetchScalarGridSpec(
            num_scalar_prefetch=0,
            grid=(num_tiles,),
            in_specs=in_specs,
            out_specs=pl.BlockSpec((1, 1), lambda i: (0, 0)),
            scratch_shapes=[pltpu.VMEM((tile_r, 1), jnp.float32)],
        ),
        compiler_params=pltpu.CompilerParams(
            dimension_semantics=("arbitrary",)),
    )(*inputs)
    return out[0, 0]


# -----------------------------------------------------------------------------
# Public wrapper (matches CrossEntropyLossWithLogits.forward)
# -----------------------------------------------------------------------------
def cross_entropy_loss_with_logits(inputs, targets, reduction, mask=None):
    assert reduction == 'mean'
    # TODO(synk): nn.CrossEntropyLoss ignore_index (-100) is not handled;
    # targets are assumed to be valid class indices in [0, C).
    if inputs.ndim > 2:
        N, C = inputs.shape[0], inputs.shape[1]
        spatial = 1
        for d in inputs.shape[2:]:
            spatial *= d
        # pure reshapes (no transpose, no dtype upcast) — keeps HBM traffic low
        logits_ncs = inputs.reshape(N, C, spatial)
        targets_ns = targets.reshape(N, spatial)
        mask_ns = None if mask is None else mask.reshape(N, spatial)
        return _ce_ncs(logits_ncs, targets_ns, mask_ns)
    else:
        targets_1d = targets.reshape(-1)
        mask_1d = None if mask is None else mask.reshape(-1)
        return _ce_rows(inputs, targets_1d, mask_1d)


# -----------------------------------------------------------------------------
# Pure-JAX reference (== F.cross_entropy(reduction='none') * mask, then mean)
# -----------------------------------------------------------------------------
def _reference(inputs, targets, mask=None):
    logp = jax.nn.log_softmax(inputs.astype(jnp.float32), axis=1)
    onehot = jax.nn.one_hot(targets, inputs.shape[1], axis=1, dtype=jnp.float32)
    ce = -jnp.sum(logp * onehot, axis=1)
    if mask is not None:
        ce = ce * mask.astype(jnp.float32)
    return jnp.mean(ce)


if __name__ == "__main__":
    key = jax.random.PRNGKey(0)
    k1, k2, k3, k4, k5 = jax.random.split(key, 5)

    # --- NCHW logits, class-index targets, float mask ---
    x = jax.random.normal(k1, (2, 4, 16, 16), jnp.float32)
    targets = jax.random.randint(k2, (2, 16, 16), 0, 4)
    mask = (jax.random.uniform(k3, (2, 16, 16)) > 0.3).astype(jnp.float32)

    loss = jax.block_until_ready(
        cross_entropy_loss_with_logits(x, targets, 'mean', mask))
    ref = _reference(x, targets, mask)
    assert jnp.allclose(loss, ref, atol=1e-5, rtol=1e-5), (loss, ref)

    # --- NCHW, no mask (separate kernel variant with no mask stream) ---
    loss_nm = jax.block_until_ready(
        cross_entropy_loss_with_logits(x, targets, 'mean', None))
    ref_nm = _reference(x, targets, None)
    assert jnp.allclose(loss_nm, ref_nm, atol=1e-5, rtol=1e-5), (loss_nm, ref_nm)

    # --- plain (N, C) logits path ---
    x2 = jax.random.normal(k4, (16, 8), jnp.float32)
    t2 = jax.random.randint(k5, (16,), 0, 8)
    loss2 = jax.block_until_ready(
        cross_entropy_loss_with_logits(x2, t2, 'mean', None))
    ref2 = _reference(x2, t2, None)
    assert jnp.allclose(loss2, ref2, atol=1e-5, rtol=1e-5), (loss2, ref2)

    print("KERNEL_OK")
</pallas_src>

<mosaic_0001>
module attributes {stable_mosaic.version = 11 : i64} {
  func.func @_ce_ncs_kernel(%arg0: i32, %arg1: i32, %arg2: memref<1x4x256xf32, #tpu.memory_space<vmem>>, %arg3: memref<1x1x256xi32, #tpu.memory_space<vmem>>, %arg4: memref<1x1x256xf32, #tpu.memory_space<vmem>>, %arg5: memref<1x1xf32, #tpu.memory_space<vmem>>, %arg6: memref<1x256xf32, #tpu.memory_space<vmem>>) attributes {dimension_semantics = [#tpu.dimension_semantics<arbitrary>, #tpu.dimension_semantics<arbitrary>], iteration_bounds = array<i64: 2, 1>, scalar_prefetch = 0 : i64, scratch_operands = 1 : i64, tpu.core_type = #tpu.core_type<tc>, window_params = [{transform_indices = @transform_0, window_bounds = array<i64: 1, 4, 256>}, {transform_indices = @transform_1, window_bounds = array<i64: 1, 1, 256>}, {transform_indices = @transform_2, window_bounds = array<i64: 1, 1, 256>}, {pipeline_mode = #tpu.pipeline_mode<synchronous>, transform_indices = @transform_3, window_bounds = array<i64: 1, 1>}]} {
    %c0_i32 = arith.constant 0 : i32
    %0 = arith.cmpi eq, %arg0, %c0_i32 : i32
    %c0_i32_0 = arith.constant 0 : i32
    %1 = arith.cmpi eq, %arg1, %c0_i32_0 : i32
    %2 = arith.andi %0, %1 : i1
    %3 = arith.extui %2 : i1 to i32
    %c0_i32_1 = arith.constant 0 : i32
    %4 = arith.cmpi ne, %3, %c0_i32_1 : i32
    scf.if %4 {
      %cst_19 = arith.constant 0.000000e+00 : f32
      %37 = vector.broadcast %cst_19 : f32 to vector<1x256xf32>
      %c0_20 = arith.constant 0 : index
      %c0_21 = arith.constant 0 : index
      %38 = vector.load %arg6[%c0_20, %c0_21] : memref<1x256xf32, #tpu.memory_space<vmem>>, vector<1x256xf32>
      tpu.vector_store %arg6[%c0_20, %c0_21], %37 {strides = array<i32>} : memref<1x256xf32, #tpu.memory_space<vmem>>, vector<1x256xf32>,
    } else {
    }
    %c0 = arith.constant 0 : index
    %c0_2 = arith.constant 0 : index
    %c0_3 = arith.constant 0 : index
    %5 = vector.load %arg2[%c0, %c0_2, %c0_3] : memref<1x4x256xf32, #tpu.memory_space<vmem>>, vector<1x4x256xf32>
    %6 = vector.shape_cast %5 : vector<1x4x256xf32> to vector<4x256xf32>
    %c0_4 = arith.constant 0 : index
    %c0_5 = arith.constant 0 : index
    %c0_6 = arith.constant 0 : index
    %7 = vector.load %arg3[%c0_4, %c0_5, %c0_6] : memref<1x1x256xi32, #tpu.memory_space<vmem>>, vector<1x1x256xi32>
    %8 = vector.shape_cast %7 : vector<1x1x256xi32> to vector<1x256xi32>
    %cst = arith.constant dense<0xFF800000> : vector<256xf32>
    %9 = vector.multi_reduction <maximumf>, %6, %cst [0] : vector<4x256xf32> to vector<256xf32>
    %10 = vector.shape_cast %9 : vector<256xf32> to vector<1x256xf32>
    %11 = vector.broadcast %10 : vector<1x256xf32> to vector<4x256xf32>
    %12 = arith.subf %6, %11 : vector<4x256xf32>
    %13 = math.exp %12 : vector<4x256xf32>
    %cst_7 = arith.constant dense<0.000000e+00> : vector<256xf32>
    %14 = vector.multi_reduction <add>, %13, %cst_7 [0] : vector<4x256xf32> to vector<256xf32>
    %15 = vector.shape_cast %14 : vector<256xf32> to vector<1x256xf32>
    %16 = math.log %15 : vector<1x256xf32>
    %17 = arith.addf %10, %16 : vector<1x256xf32>
    %18 = tpu.iota {dimensions = array<i32: 0>} : vector<4x256xi32>
    %19 = vector.broadcast %8 : vector<1x256xi32> to vector<4x256xi32>
    %20 = arith.cmpi eq, %18, %19 : vector<4x256xi32>
    %cst_8 = arith.constant 0.000000e+00 : f32
    %21 = vector.broadcast %cst_8 : f32 to vector<4x256xf32>
    %22 = arith.select %20, %6, %21 : vector<4x256xi1>, vector<4x256xf32>
    %cst_9 = arith.constant dense<0.000000e+00> : vector<256xf32>
    %23 = vector.multi_reduction <add>, %22, %cst_9 [0] : vector<4x256xf32> to vector<256xf32>
    %24 = vector.shape_cast %23 : vector<256xf32> to vector<1x256xf32>
    %25 = arith.subf %17, %24 : vector<1x256xf32>
    %c0_10 = arith.constant 0 : index
    %c0_11 = arith.constant 0 : index
    %c0_12 = arith.constant 0 : index
    %26 = vector.load %arg4[%c0_10, %c0_11, %c0_12] : memref<1x1x256xf32, #tpu.memory_space<vmem>>, vector<1x1x256xf32>
    %27 = vector.shape_cast %26 : vector<1x1x256xf32> to vector<1x256xf32>
    %28 = arith.mulf %25, %27 : vector<1x256xf32>
    %c0_13 = arith.constant 0 : index
    %c0_14 = arith.constant 0 : index
    %29 = vector.load %arg6[%c0_13, %c0_14] : memref<1x256xf32, #tpu.memory_space<vmem>>, vector<1x256xf32>
    %30 = arith.addf %29, %28 : vector<1x256xf32>
    %c0_15 = arith.constant 0 : index
    %c0_16 = arith.constant 0 : index
    %31 = vector.load %arg6[%c0_15, %c0_16] : memref<1x256xf32, #tpu.memory_space<vmem>>, vector<1x256xf32>
    tpu.vector_store %arg6[%c0_15, %c0_16], %30 {strides = array<i32>} : memref<1x256xf32, #tpu.memory_space<vmem>>, vector<1x256xf32>,
    %c1_i32 = arith.constant 1 : i32
    %32 = arith.cmpi eq, %arg0, %c1_i32 : i32
    %c0_i32_17 = arith.constant 0 : i32
    %33 = arith.cmpi eq, %arg1, %c0_i32_17 : i32
    %34 = arith.andi %32, %33 : i1
    %35 = arith.extui %34 : i1 to i32
    %c0_i32_18 = arith.constant 0 : i32
    %36 = arith.cmpi ne, %35, %c0_i32_18 : i32
    scf.if %36 {
      %c0_19 = arith.constant 0 : index
      %c0_20 = arith.constant 0 : index
      %37 = vector.load %arg6[%c0_19, %c0_20] : memref<1x256xf32, #tpu.memory_space<vmem>>, vector<1x256xf32>
      %38 = vector.shape_cast %37 : vector<1x256xf32> to vector<1x1x256xf32>
      %cst_21 = arith.constant dense<0.000000e+00> : vector<1xf32>
      %39 = vector.multi_reduction <add>, %38, %cst_21 [1, 2] : vector<1x1x256xf32> to vector<1xf32>
      %40 = vector.shape_cast %39 : vector<1xf32> to vector<1x1x1xf32>
      %41 = vector.extract %40[0, 0, 0] : f32 from vector<1x1x1xf32>
      %42 = vector.broadcast %41 : f32 to vector<1x1xf32>
      %cst_22 = arith.constant 0.001953125 : f32
      %43 = vector.broadcast %cst_22 : f32 to vector<1x1xf32>
      %44 = arith.mulf %42, %43 : vector<1x1xf32>
      %c0_23 = arith.constant 0 : index
      %c0_24 = arith.constant 0 : index
      %45 = vector.load %arg5[%c0_23, %c0_24] : memref<1x1xf32, #tpu.memory_space<vmem>>, vector<1x1xf32>
      tpu.vector_store %arg5[%c0_23, %c0_24], %44 {strides = array<i32>} : memref<1x1xf32, #tpu.memory_space<vmem>>, vector<1x1xf32>,
    } else {
    }
    return
  }
  func.func @transform_0(%arg0: i32, %arg1: i32) -> (i32, i32, i32) {
    %c0_i32 = arith.constant 0 : i32
    %c0_i32_0 = arith.constant 0 : i32
    return %arg0, %c0_i32, %arg1 : i32, i32, i32
  }
  func.func @transform_1(%arg0: i32, %arg1: i32) -> (i32, i32, i32) {
    %c0_i32 = arith.constant 0 : i32
    %c0_i32_0 = arith.constant 0 : i32
    return %arg0, %c0_i32, %arg1 : i32, i32, i32
  }
  func.func @transform_2(%arg0: i32, %arg1: i32) -> (i32, i32, i32) {
    %c0_i32 = arith.constant 0 : i32
    %c0_i32_0 = arith.constant 0 : i32
    return %arg0, %c0_i32, %arg1 : i32, i32, i32
  }
  func.func @transform_3(%arg0: i32, %arg1: i32) -> (i32, i32) {
    %c0_i32 = arith.constant 0 : i32
    %c0_i32_0 = arith.constant 0 : i32
    %c0_i32_1 = arith.constant 0 : i32
    return %c0_i32, %c0_i32_0 : i32, i32
  }
}

</mosaic_0001>

<llo_original>
// kernel: tpu_custom_call.1
$region0: #{tpu_custom_call.1}
  #allocation0 [shape = 'u32[]', space=smem, size = 0x4, offset = 0x4, fixed_abs, tag = 'smem constant byte address 0x4 - core index']
  #allocation1 [shape = 'u32[144,128]{1,0:T(1,128)}', space=vmem, size = 0x12000, scoped, tag = 'internal scratch']
  #allocation2 [shape = 'f32[1,256]{1,0:T(1,128)}', space=vmem, size = 0x400, scoped, tag = 'scratch operand']
  %s0 = inlined_call_operand.hbm [shape: f32[2,4,256], index: 0, kind: input, shape index: {}]
  %s1 = inlined_call_operand.hbm [shape: s32[2,1,256], index: 1, kind: input, shape index: {}]
  %s2 = inlined_call_operand.vmem [shape: f32[2,1,256], index: 2, kind: input, shape index: {}]
  %s3 = inlined_call_operand.hbm [shape: f32[1,1], index: 3, kind: output, shape index: {}]
  %s4 = sld [smem:[#allocation0]]
  $region61: #{tpu_custom_call.1} parent=0
    _
  %s6 = ssub.s32 1, %s4
  %s7 = scalar_select 0, %s6, %s4
  $region1: #{tpu_custom_call.1} parent=0
    #allocation3 [shape = 'u8[8192]{0}', space=vmem, size = 0x2000, scoped, tag = 'input window, operand 0']
    #allocation4 [shape = 's32[2]{0}', space=sflag, size = 0x8, scoped, tag = 'scoped memory for tpu_custom_call.1']
    #allocation5 [shape = 's32[2]{0}', space=sflag, size = 0x8, scoped, tag = 'scoped memory for tpu_custom_call.1']
    #allocation6 [shape = 'u8[2048]{0}', space=vmem, size = 0x800, scoped, tag = 'input window, operand 1']
    #allocation7 [shape = 's32[2]{0}', space=sflag, size = 0x8, scoped, tag = 'scoped memory for tpu_custom_call.1']
    #allocation8 [shape = 'u8[512]{0}', space=vmem, size = 0x400, scoped, tag = 'output window, operand 0, single buffered']
    %8 = vsyncpa [#allocation4], 0
    %s9 = scalar_lea.sflag [#allocation4], 1
    %10 = vsyncpa %s9, 0
    %11 = vsyncpa [#allocation7], 0
    %s12 = scalar_lea.sflag [#allocation7], 1
    %13 = vsyncpa %s12, 0
    %14 = vsyncpa [#allocation5], 0
    loop: start=0, step=1, limit=4
    $region2: #{tpu_custom_call.1} parent=1 // loop_pre_header
      _
    $region3: #{tpu_custom_call.1} parent=1 // loop_header
      %s16 = sphi 0, %s20
      %p17 = scmp.ge.s32.totalorder %s16, 4
      %s23 = sphi 0, %s35
      %s24 = sphi 0, %s31
      %s25 = sphi 0, %s23
      %s26 = sphi 0, %s24
      %s27 = sphi 0, %s25
      %s28 = sphi 0, %s26
      %s40 = sphi 0, %s42
      %s43 = sphi 0, %s40
      %s44 = sphi 0, %s43
      %s60 = sphi 0, %s44
      %s68 = sphi 0, %s70
      %s71 = sphi 0, %s68
      %s72 = sphi 0, %s71
      %s88 = sphi 0, %s72
      %s96 = sphi 0, %s98
      %s99 = sphi 0, %s96
      %s100 = sphi 0, %s99
      %s116 = sphi 0, %s100
      %s120 = sphi 0, %s120
      %s122 = sphi 0, %s120
      %s123 = sphi 0, %s122
      %s137 = sphi 0, %s123
    $region4: #{tpu_custom_call.1} parent=1 // loop_header_branch
      %19 = sbr.rel (%p17) target = $region8
    $region5: #{tpu_custom_call.1} parent=1 // loop_body
      %s21 = ssub.s32 %s16, 1
      %s22 = ssub.s32 %s16, 2
      %s29 = sadd.s32 1, %s24
      %p30 = scmp.ge.s32.totalorder %s29, 1
      %s31 = scalar_select %p30, 0, %s29
      %s32 = sadd.s32 1, %s23
      %s33 = scalar_select %p30, %s32, %s23
      %p34 = scmp.ge.s32.totalorder %s33, 2
      %s35 = scalar_select %p34, 0, %s33
      %s36 = ssub.s32 %s23, %s35
      %s37 = ssub.s32 %s24, %s31
      %s38 = sor.u32 %s36, %s37
      %p39 = scmp.eq.s32.totalorder %s38, 0
      %s41 = sadd.s32 %s40, 1
      %s42 = scalar_select %p39, %s40, %s41
      %p45 = pneg %p39
      %p46 = scmp.eq.s32.totalorder %s16, 1
      %p47 = por %p45, %p46
      %p48 = scmp.ne.s32.totalorder %s40, %s43
      %p49 = scmp.eq.s32.totalorder %s16, 0
      %p50 = por %p48, %p49
      %p51 = scmp.ne.s32.totalorder %s40, %s43
      %p52 = scmp.eq.s32.totalorder %s21, 1
      %p53 = por %p51, %p52
      %p54 = scmp.ne.s32.totalorder %s43, %s44
      %p55 = scmp.eq.s32.totalorder %s21, 0
      %p56 = por %p54, %p55
      %p57 = scmp.ne.s32.totalorder %s43, %s44
      %p58 = scmp.eq.s32.totalorder %s22, 1
      %p59 = por %p57, %p58
      %p61 = scmp.ne.s32.totalorder %s44, %s60
      %p62 = scmp.eq.s32.totalorder %s22, 0
      %p63 = por %p61, %p62
      %s64 = ssub.s32 %s23, %s35
      %s65 = ssub.s32 %s24, %s31
      %s66 = sor.u32 %s64, %s65
      %p67 = scmp.eq.s32.totalorder %s66, 0
      %s69 = sadd.s32 %s68, 1
      %s70 = scalar_select %p67, %s68, %s69
      %p73 = pneg %p67
      %p74 = scmp.eq.s32.totalorder %s16, 1
      %p75 = por %p73, %p74
      %p76 = scmp.ne.s32.totalorder %s68, %s71
      %p77 = scmp.eq.s32.totalorder %s16, 0
      %p78 = por %p76, %p77
      %p79 = scmp.ne.s32.totalorder %s68, %s71
      %p80 = scmp.eq.s32.totalorder %s21, 1
      %p81 = por %p79, %p80
      %p82 = scmp.ne.s32.totalorder %s71, %s72
      %p83 = scmp.eq.s32.totalorder %s21, 0
      %p84 = por %p82, %p83
      %p85 = scmp.ne.s32.totalorder %s71, %s72
      %p86 = scmp.eq.s32.totalorder %s22, 1
      %p87 = por %p85, %p86
      %p89 = scmp.ne.s32.totalorder %s72, %s88
      %p90 = scmp.eq.s32.totalorder %s22, 0
      %p91 = por %p89, %p90
      %s92 = ssub.s32 %s23, %s35
      %s93 = ssub.s32 %s24, %s31
      %s94 = sor.u32 %s92, %s93
      %p95 = scmp.eq.s32.totalorder %s94, 0
      %s97 = sadd.s32 %s96, 1
      %s98 = scalar_select %p95, %s96, %s97
      %p101 = pneg %p95
      %p102 = scmp.eq.s32.totalorder %s16, 1
      %p103 = por %p101, %p102
      %p104 = scmp.ne.s32.totalorder %s96, %s99
      %p105 = scmp.eq.s32.totalorder %s16, 0
      %p106 = por %p104, %p105
      %p107 = scmp.ne.s32.totalorder %s96, %s99
      %p108 = scmp.eq.s32.totalorder %s21, 1
      %p109 = por %p107, %p108
      %p110 = scmp.ne.s32.totalorder %s99, %s100
      %p111 = scmp.eq.s32.totalorder %s21, 0
      %p112 = por %p110, %p111
      %p113 = scmp.ne.s32.totalorder %s99, %s100
      %p114 = scmp.eq.s32.totalorder %s22, 1
      %p115 = por %p113, %p114
      %p117 = scmp.ne.s32.totalorder %s100, %s116
      %p118 = scmp.eq.s32.totalorder %s22, 0
      %p119 = por %p117, %p118
      %s121 = sadd.s32 %s120, 1
      %p124 = scmp.eq.s32.totalorder %s16, 1
      %p125 = scmp.ne.s32.totalorder %s120, %s122
      %p126 = scmp.eq.s32.totalorder %s16, 0
      %p127 = por %p125, %p126
      %p128 = scmp.ne.s32.totalorder %s120, %s122
      %p129 = scmp.eq.s32.totalorder %s21, 1
      %p130 = por %p128, %p129
      %p131 = scmp.ne.s32.totalorder %s122, %s123
      %p132 = scmp.eq.s32.totalorder %s21, 0
      %p133 = por %p131, %p132
      %p134 = scmp.ne.s32.totalorder %s122, %s123
      %p135 = scmp.eq.s32.totalorder %s22, 1
      %p136 = por %p134, %p135
      %p138 = scmp.ne.s32.totalorder %s123, %s137
      %p139 = scmp.eq.s32.totalorder %s22, 0
      %p140 = por %p138, %p139
      %p141 = scmp.le.s32.totalorder 1, %s16
      %p142 = scmp.lt.s32.totalorder %s16, 3
      %p143 = pnand %p141, %p142
      %p144 = pneg %p143
      // Predicated region
      $region9: #{tpu_custom_call.1} parent=5 // pred_check
        _
      $region10: #{tpu_custom_call.1} parent=5 // pred_check_branch
        %146 = sbr.rel (%p143) target = $region12
      $region11: #{tpu_custom_call.1} parent=5 // pred_region
        %s147 = ssub.s32 %s16, 1
      $region12: #{tpu_custom_call.1} parent=5 // pred_fallthru
        _
      %p148 = scmp.lt.s32.totalorder %s16, 2
      // Predicated region
      $region13: #{tpu_custom_call.1} parent=5 // pred_check
        %p149 = pneg %p148
      $region14: #{tpu_custom_call.1} parent=5 // pred_check_branch
        %151 = sbr.rel (%p149) target = $region16
      $region15: #{tpu_custom_call.1} parent=5 // pred_region
        // Predicated region
        $region17: #{tpu_custom_call.1} parent=15 // pred_check
          %p152 = pneg %p50
        $region18: #{tpu_custom_call.1} parent=15 // pred_check_branch
          %154 = sbr.rel (%p152) target = $region20
        $region19: #{tpu_custom_call.1} parent=15 // pred_region
          %s155 = sand.u32 %s40, 1
          %s156 = scalar_lea.sflag [#allocation4], %s155
          %s157 = sand.u32 %s40, 1
          %s158 = smul.addr %s157, 8
          %s159 = scalar_lea.vmem [#allocation3], %s158
          %s160 = smul.u32 2, %s24
          %s162 = ssub.s32 128, 128
          %163 = vsyncadd %s156, %s162
          %s164 = smul.addr %s23, 2
          %s165 = sadd.s32 %s160, %s164
          %s166 = smul.addr %s165, 64
          %s167 = scalar_lea.hbm %s0, %s166
          %s169 = sshll.u32 %s159, 4
          %s170 = int_to_ptr.vmem [resolvable:$true] %s169
          %172 = dma.hbm_to_vmem [thread:$0]  %s167, 128, %s170, %s156
        $region20: #{tpu_custom_call.1} parent=15 // pred_fallthru
          _
        // Predicated region
        $region21: #{tpu_custom_call.1} parent=15 // pred_check
          %p173 = pneg %p78
        $region22: #{tpu_custom_call.1} parent=15 // pred_check_branch
          %175 = sbr.rel (%p173) target = $region24
        $region23: #{tpu_custom_call.1} parent=15 // pred_region
          %s176 = sand.u32 %s68, 1
          %s177 = scalar_lea.sflag [#allocation7], %s176
          %s178 = sand.u32 %s68, 1
          %s179 = smul.addr %s178, 2
          %s180 = scalar_lea.vmem [#allocation6], %s179
          %s181 = smul.u32 2, %s24
          %s183 = ssub.s32 32, 32
          %184 = vsyncadd %s177, %s183
          %s185 = smul.addr %s23, 2
          %s186 = sadd.s32 %s181, %s185
          %s187 = smul.addr %s186, 16
          %s188 = scalar_lea.hbm %s1, %s187
          %s190 = sshll.u32 %s180, 4
          %s191 = int_to_ptr.vmem [resolvable:$true] %s190
          %193 = dma.hbm_to_vmem [thread:$0]  %s188, 32, %s191, %s177
        $region24: #{tpu_custom_call.1} parent=15 // pred_fallthru
          _
        // Predicated region
        $region25: #{tpu_custom_call.1} parent=15 // pred_check
          %p194 = pneg %p106
        $region26: #{tpu_custom_call.1} parent=15 // pred_check_branch
          %196 = sbr.rel (%p194) target = $region28
        $region27: #{tpu_custom_call.1} parent=15 // pred_region
          %s197 = smul.u32 2, %s24
          %p198 = scmp.lt.s32.totalorder %s23, 1
          %s199 = scalar_select %p198, %s23, 1
          %p200 = scmp.lt.s32.totalorder %s197, 1
          %s201 = scalar_select %p200, %s197, 1
          %s202 = smul.addr %s199, 2
          %s203 = sadd.s32 %s201, %s202
          %s204 = scalar_lea.vmem %s2, %s203
          %s205 = smul.u32 2, %s24
        $region28: #{tpu_custom_call.1} parent=15 // pred_fallthru
          _
      $region16: #{tpu_custom_call.1} parent=5 // pred_fallthru
        _
      %p206 = scmp.le.s32.totalorder 1, %s16
      %p207 = scmp.lt.s32.totalorder %s16, 3
      %p208 = pnand %p206, %p207
      %p209 = pneg %p208
      // Predicated region
      $region29: #{tpu_custom_call.1} parent=5 // pred_check
        _
      $region30: #{tpu_custom_call.1} parent=5 // pred_check_branch
        %211 = sbr.rel (%p208) target = $region32
      $region31: #{tpu_custom_call.1} parent=5 // pred_region
        %s212 = ssub.s32 %s16, 1
        %s213 = sand.u32 %s43, 1
        %s214 = scalar_lea.sflag [#allocation4], %s213
        %s215 = sand.u32 %s43, 1
        %s216 = smul.addr %s215, 8
        %s217 = scalar_lea.vmem [#allocation3], %s216
        // Predicated region
        $region33: #{tpu_custom_call.1} parent=31 // pred_check
          %p218 = pneg %p56
        $region34: #{tpu_custom_call.1} parent=31 // pred_check_branch
          %220 = sbr.rel (%p218) target = $region36
        $region35: #{tpu_custom_call.1} parent=31 // pred_region
          %221 = dma.done %s214, 128
        $region36: #{tpu_custom_call.1} parent=31 // pred_fallthru
          _
        %s222 = sand.u32 %s71, 1
        %s223 = scalar_lea.sflag [#allocation7], %s222
        %s224 = sand.u32 %s71, 1
        %s225 = smul.addr %s224, 2
        %s226 = scalar_lea.vmem [#allocation6], %s225
        // Predicated region
        $region37: #{tpu_custom_call.1} parent=31 // pred_check
          %p227 = pneg %p84
        $region38: #{tpu_custom_call.1} parent=31 // pred_check_branch
          %229 = sbr.rel (%p227) target = $region40
        $region39: #{tpu_custom_call.1} parent=31 // pred_region
          %230 = dma.done %s223, 32
        $region40: #{tpu_custom_call.1} parent=31 // pred_fallthru
          _
        %s231 = sand.u32 %s43, 1
        %s232 = scalar_lea.sflag [#allocation4], %s231
        %s233 = sand.u32 %s43, 1
        %s234 = smul.addr %s233, 8
        %s235 = scalar_lea.vmem [#allocation3], %s234
        %p236 = pneg %p56
        %p237 = pneg %p53
        %s238 = sand.u32 %s71, 1
        %s239 = scalar_lea.sflag [#allocation7], %s238
        %s240 = sand.u32 %s71, 1
        %s241 = smul.addr %s240, 2
        %s242 = scalar_lea.vmem [#allocation6], %s241
        %p243 = pneg %p84
        %p244 = pneg %p81
        %s245 = smul.u32 2, %s26
        %p246 = scmp.lt.s32.totalorder %s25, 1
        %s247 = scalar_select %p246, %s25, 1
        %p248 = scmp.lt.s32.totalorder %s245, 1
        %s249 = scalar_select %p248, %s245, 1
        %s250 = smul.addr %s247, 2
        %s251 = sadd.s32 %s249, %s250
        %s252 = scalar_lea.vmem %s2, %s251
        %p253 = pneg %p112
        %p254 = pneg %p109
        %p255 = pneg %p133
        %p256 = pneg %p130
        %s257 = smul.u32 2, %s26
        %s258 = smul.u32 2, %s26
        %s259 = smul.u32 2, %s26
        %p260 = scmp.lt.s32.totalorder %s25, 1
        %s261 = scalar_select %p260, %s25, 1
        %p262 = scmp.lt.s32.totalorder %s259, 1
        %s263 = scalar_select %p262, %s259, 1
        %s264 = smul.addr %s261, 2
        %s265 = sadd.s32 %s263, %s264
        %s266 = scalar_lea.vmem %s2, %s265
        %s267 = smul.u32 2, %s26
        %p268 = scmp.eq.s32.totalorder %s25, 0
        %p269 = scmp.eq.s32.totalorder %s26, 0
        %p270 = pnand %p268, %p269
        %p271 = pneg %p270
        // Predicated region
        $region41: #{tpu_custom_call.1} parent=31 // pred_check
          _
        $region42: #{tpu_custom_call.1} parent=31 // pred_check_branch
          %273 = sbr.rel (%p270) target = $region44
        $region43: #{tpu_custom_call.1} parent=31 // pred_region
          %v274 = vlaneseq
          %vm275 = vcmp.ge.s32.totalorder %v274, 0
          %vm276 = vcmp.lt.s32.totalorder %v274, 256
          %vm277 = vmand %vm275, %vm276
          %278 = vst.msk [vmem:[#allocation2] sm:$0x3] %vm277, 0.0
        $region44: #{tpu_custom_call.1} parent=31 // pred_fallthru
          _
        %v279 = vld [vmem:[%s217] sm:$0xff]
        %v280 = vld [vmem:[%s226] sm:$0x3]
        %v282 = vcombine.high %v279, %v279
        %vm284 = vcmask 1043456
        %v285 = vsel %vm284, %v279, -inf
        %v286 = vrot.slane %v285, 4
        %v287 = vmax.f32 %v285, %v286
        %v288 = vrot.slane %v287, 2
        %v289 = vmax.f32 %v287, %v288
        %v290 = vrot.slane %v289, 1
        %v291 = vmax.f32 %v289, %v290
        %v292 = vsel %vm284, %v282, -inf
        %v293 = vrot.slane %v292, 4
        %v294 = vmax.f32 %v292, %v293
        %v295 = vrot.slane %v294, 2
        %v296 = vmax.f32 %v294, %v295
        %v297 = vrot.slane %v296, 1
        %v298 = vmax.f32 %v296, %v297
        %v301 = vcombine.low %v291, %v298
        %v303 = vsub.f32 %v279, %v301
        %v304 = vmul.f32 %v303, 1.442695
        %v305 = vpow.pop %v304
        %v307 = vcombine.high %v305, %v305
        %v309 = vsel %vm284, %v305, 0.0
        %v310 = vrot.slane %v309, 4
        %v311 = vadd.f32 %v309, %v310
        %v312 = vrot.slane %v311, 2
        %v313 = vadd.f32 %v311, %v312
        %v314 = vrot.slane %v313, 1
        %v315 = vadd.f32 %v313, %v314
        %v316 = vsel %vm284, %v307, 0.0
        %v317 = vrot.slane %v316, 4
        %v318 = vadd.f32 %v316, %v317
        %v319 = vrot.slane %v318, 2
        %v320 = vadd.f32 %v318, %v319
        %v321 = vrot.slane %v320, 1
        %v322 = vadd.f32 %v320, %v321
        %v323 = vlog2.pop %v315
        %v324 = vmul.f32 %v323, 0.6931472
        %v325 = vlog2.pop %v322
        %v326 = vmul.f32 %v325, 0.6931472
        %v327 = vadd.f32 %v291, %v324
        %v328 = vadd.f32 %v298, %v326
        %v329 = vlaneseq
        %v330 = vshrl.u32 %v329, 7
        %v331 = vlaneseq
        %v332 = vshrl.u32 %v331, 7
        %v333 = vsub.s32 0, %v332
        %v334 = vrot.slane %v280, %v333
        %v335 = vlaneseq
        %v336 = vshrl.u32 %v335, 7
        %v337 = vsub.s32 1, %v336
        %v338 = vrot.slane %v280, %v337
        %vm339 = vcmp.eq.s32.totalorder %v330, %v334
        %vm340 = vcmp.eq.s32.totalorder %v330, %v338
        %v341 = vsel %vm339, %v279, 0.0
        %v342 = vsel %vm340, %v282, 0.0
        %v343 = vsel %vm284, %v341, 0.0
        %v344 = vrot.slane %v343, 4
        %v345 = vadd.f32 %v343, %v344
        %v346 = vrot.slane %v345, 2
        %v347 = vadd.f32 %v345, %v346
        %v348 = vrot.slane %v347, 1
        %v349 = vadd.f32 %v347, %v348
        %v350 = vsel %vm284, %v342, 0.0
        %v351 = vrot.slane %v350, 4
        %v352 = vadd.f32 %v350, %v351
        %v353 = vrot.slane %v352, 2
        %v354 = vadd.f32 %v352, %v353
        %v355 = vrot.slane %v354, 1
        %v356 = vadd.f32 %v354, %v355
        %v357 = vsub.f32 %v327, %v349
        %v358 = vsub.f32 %v328, %v356
        %v359 = vld [vmem:[%s266] sm:$0x3]
        %v361 = vlaneseq
        %v362 = vshrl.u32 %v361, 7
        %v363 = vsub.s32 0, %v362
        %v364 = vrot.slane %v359, %v363
        %v365 = vlaneseq
        %v366 = vshrl.u32 %v365, 7
        %v367 = vsub.s32 1, %v366
        %v368 = vrot.slane %v359, %v367
        %v371 = vmul.f32 %v357, %v364
        %v372 = vmul.f32 %v358, %v368
        %v373 = vld [vmem:[#allocation2] sm:$0x3]
        %v376 = vcombine.low %v371, %v372
        %v378 = vunpack.c.l.s4 1966171168
        %v379 = vunpack.c.0.s8 %v378
        %v380 = vlaneseq
        %v381 = vshrl.u32 %v380, 7
        %v382 = vsub.s32 %v379, %v381
        %v383 = vrot.slane %v376, %v382
        %v385 = vunpack.c.l.s4 1966171168
        %v386 = vunpack.c.0.s8 %v385
        %v387 = vlaneseq
        %v388 = vshrl.u32 %v387, 7
        %v389 = vsub.s32 %v386, %v388
        %v390 = vrot.slane %v383, %v389
        %v392 = vadd.f32 %v373, %v390
        %v393 = vlaneseq
        %vm394 = vcmp.ge.s32.totalorder %v393, 0
        %vm395 = vcmp.lt.s32.totalorder %v393, 256
        %vm396 = vmand %vm394, %vm395
        %397 = vst.msk [vmem:[#allocation2] sm:$0x3] %vm396, %v392
        %p398 = scmp.eq.s32.totalorder %s25, 1
        %p399 = pnand %p398, %p269
        %p400 = pneg %p399
        // Predicated region
        $region45: #{tpu_custom_call.1} parent=31 // pred_check
          _
        $region46: #{tpu_custom_call.1} parent=31 // pred_check_branch
          %402 = sbr.rel (%p399) target = $region48
        $region47: #{tpu_custom_call.1} parent=31 // pred_region
          %v403 = vld [vmem:[#allocation2] sm:$0x3]
          %v405 = vlaneseq
          %v406 = vshrl.u32 %v405, 7
          %v407 = vsub.s32 0, %v406
          %v408 = vrot.slane %v403, %v407
          %v409 = vlaneseq
          %v410 = vshrl.u32 %v409, 7
          %v411 = vsub.s32 1, %v410
          %v412 = vrot.slane %v403, %v411
          %vm415 = vcmask 1040384
          %v416 = vsel %vm415, %v408, 0.0
          %v417 = vsel %vm415, %v412, 0.0
          %v418 = vadd.f32 %v416, %v417
          %419 = vadd.xlane.f32.xlu0 %v418
          %v420 = vpop.xlane.xlu0 %419
          %v421 = vrot.slane %v420, 4
          %v422 = vadd.f32 %v420, %v421
          %v423 = vrot.slane %v422, 2
          %v424 = vadd.f32 %v422, %v423
          %v425 = vrot.slane %v424, 1
          %v426 = vadd.f32 %v424, %v425
          %s427 = vtos %v426
          %v428 = vstv %s427
          %v429 = vmul.f32 %v428, 0.001953125
          %vm430 = vcmask 0
          %431 = vst.msk [vmem:[#allocation8] sm:$0x1] %vm430, %v429
        $region48: #{tpu_custom_call.1} parent=31 // pred_fallthru
          _
        // Predicated region
        $region49: #{tpu_custom_call.1} parent=31 // pred_check
          %p432 = pneg %p130
        $region50: #{tpu_custom_call.1} parent=31 // pred_check_branch
          %434 = sbr.rel (%p432) target = $region52
        $region51: #{tpu_custom_call.1} parent=31 // pred_region
          %s436 = ssub.s32 16, 16
          %437 = vsyncadd [#allocation5], %s436
          %s439 = sshll.u32 [#allocation8], 4
          %s440 = int_to_ptr.vmem [resolvable:$true] %s439
          %442 = dma.vmem_to_hbm [thread:$0]  %s440, 16, %s3, [#allocation5]
        $region52: #{tpu_custom_call.1} parent=31 // pred_fallthru
          _
        // Predicated region
        $region53: #{tpu_custom_call.1} parent=31 // pred_check
          %p443 = pneg %p130
        $region54: #{tpu_custom_call.1} parent=31 // pred_check_branch
          %445 = sbr.rel (%p443) target = $region56
        $region55: #{tpu_custom_call.1} parent=31 // pred_region
          %446 = dma.done [#allocation5], 16
        $region56: #{tpu_custom_call.1} parent=31 // pred_fallthru
          _
      $region32: #{tpu_custom_call.1} parent=5 // pred_fallthru
        _
      %p447 = scmp.le.s32.totalorder 2, %s16
      // Predicated region
      $region57: #{tpu_custom_call.1} parent=5 // pred_check
        %p448 = pneg %p447
      $region58: #{tpu_custom_call.1} parent=5 // pred_check_branch
        %450 = sbr.rel (%p448) target = $region60
      $region59: #{tpu_custom_call.1} parent=5 // pred_region
        %s451 = ssub.s32 %s16, 2
      $region60: #{tpu_custom_call.1} parent=5 // pred_fallthru
        _
    $region6: #{tpu_custom_call.1} parent=1 // loop_footer
      %s20 = sadd.s32 1, %s16
    $region7: #{tpu_custom_call.1} parent=1 // loop_footer_branch
      %15 = sbr.rel target = $region3
    $region8: #{tpu_custom_call.1} parent=1 // loop_exit
      _
    %452 = vsyncpa [#allocation4], 1
    %s453 = scalar_lea.sflag [#allocation4], 1
    %454 = vsyncpa %s453, 1
    %455 = vsyncpa [#allocation7], 1
    %s456 = scalar_lea.sflag [#allocation7], 1
    %457 = vsyncpa %s456, 1
    %458 = vsyncpa [#allocation5], 1
    %s459 = scalar_lea.sflag [#allocation5], 1
    %460 = vsyncpa %s459, 1

</llo_original>
